<compile_context>
chip_gen: v6e
topology: v6e:2x2x1
jax: 0.10.0
libtpu: 0.0.40
codegen_flags: <defaults>
</compile_context>

<pallas_src>
import functools

import numpy as np
import jax
import jax.numpy as jnp
from jax import lax
from jax.experimental import pallas as pl
from jax.experimental.pallas import tpu as pltpu


def _round_up(x, m):
    return ((x + m - 1) // m) * m


@functools.lru_cache(maxsize=None)
def _fused_weights(L, k):
    """Fused AdaptiveAvgPool1d(7)->AdaptiveAvgPool1d(1) weights.

    Returns a (k, k*L) float32 block-diagonal matrix whose j-th row holds the
    fused per-position weight vector for the j-th packed logical row.
    """
    w = np.zeros((L,), dtype=np.float64)
    for i in range(7):
        start = (i * L) // 7
        end = -((-(i + 1) * L) // 7)          # ceil(((i+1)*L)/7)
        w[start:end] += 1.0 / (7.0 * (end - start))
    wt = np.zeros((k, k * L), dtype=np.float32)
    for j in range(k):
        wt[j, j * L:(j + 1) * L] = w
    return jnp.asarray(wt)


def _pool_kernel_lane_dense(x_ref, w_ref, o_ref):
    # o[j, r] = sum_c w[j, c] * x[r, c]  -> lane-dense (k, tile_r) output slab.
    x = x_ref[...].astype(jnp.float32)
    acc = lax.dot_general(w_ref[...], x, (((1,), (1,)), ((), ())),
                          preferred_element_type=jnp.float32)
    o_ref[...] = acc.astype(o_ref.dtype)


def _pool_kernel_row_major(x_ref, w_ref, o_ref):
    # Fallback for very large L (row tile < 128): (tile_r, k) output; output bytes
    # are negligible vs. the huge-L input stream, so layout does not matter here.
    x = x_ref[...].astype(jnp.float32)
    acc = lax.dot_general(x, w_ref[...], (((1,), (1,)), ((), ())),
                          preferred_element_type=jnp.float32)
    o_ref[...] = acc.astype(o_ref.dtype)


def model_forward(x):
    """x: (N, C, L) -> (N, C, 1); matches AdaptiveAvgPool1d(7) -> AdaptiveAvgPool1d(1)."""
    N, C, L = (int(d) for d in x.shape)
    R = N * C
    out_dtype = x.dtype

    # ---- small-L lane packing: fold k consecutive logical rows into one lane row.
    k = 1
    if L < 128:
        k = max(1, 128 // L)
        while k > 1 and R % k:
            k -= 1
    Rp, Lp = R // k, k * L
    x2d = x.reshape(Rp, Lp)                     # free contiguous reshape, native dtype

    wt = _fused_weights(L, k)                   # (k, Lp) float32, lane-major

    # ---- generation-aware VMEM budget / tile sizing.
    try:
        vmem_cap = pltpu.get_tpu_info().vmem_capacity_bytes
    except Exception:
        vmem_cap = 64 * 1024 * 1024             # conservative (v7x-like) default
    if vmem_cap >= 100 * 1024 * 1024:           # v5e / v6e: 128 MiB physical VMEM
        vmem_limit = 96 * 1024 * 1024
        per_buffer_target = 24 * 1024 * 1024
    else:                                       # v7x: 64 MiB physical VMEM
        vmem_limit = 32 * 1024 * 1024
        per_buffer_target = 12 * 1024 * 1024

    lane_pad = _round_up(Lp, 128)               # VMEM pads the lane axis to 128
    itemsize = int(jnp.dtype(x.dtype).itemsize)
    w_vmem = 8 * lane_pad * 4                   # sublane/lane-padded f32 weight tile
    usable = vmem_limit - 2 * w_vmem - (2 << 20)
    per_buffer = min(per_buffer_target, max(1 << 20, usable // 2))
    # per-row VMEM cost: native-dtype input row + double-buffered padded output column
    row_bytes = lane_pad * itemsize + 2 * 8 * 4
    budget_rows = max(8, (per_buffer // row_bytes) // 8 * 8)

    if 2 * 8 * row_bytes > max(usable, 0):
        # TODO(synk): add an L-tiled reduction path (second "arbitrary" grid axis +
        # VMEM accumulator) for rows too large to double-buffer even 8 at a time.
        raise NotImplementedError(f"L={L} too large for single-pass reduction tiling")

    if Rp <= budget_rows:
        if Rp >= 256:                           # >=2 grid steps feed both v7x TCs
            tile_r = _round_up(pl.cdiv(Rp, 2), 128)
        else:
            tile_r = Rp                         # single full-extent block
        lane_dense = True
    elif budget_rows >= 128:
        tile_r = (budget_rows // 128) * 128     # multiple of 128 -> lane-dense out legal
        lane_dense = True
    else:
        tile_r = budget_rows                    # huge L: small row tile, row-major out
        lane_dense = False

    num_tiles = pl.cdiv(Rp, tile_r)             # ragged last block handled by Pallas

    compiler_params = pltpu.CompilerParams(
        dimension_semantics=("parallel",),      # independent rows -> megacore / dual-TC
        vmem_limit_bytes=vmem_limit,
    )

    if lane_dense:
        out = pl.pallas_call(
            _pool_kernel_lane_dense,
            out_shape=jax.ShapeDtypeStruct((k, num_tiles * tile_r), out_dtype),
            grid=(num_tiles,),
            in_specs=[
                pl.BlockSpec((tile_r, Lp), lambda i: (i, 0)),
                pl.BlockSpec((k, Lp), lambda i: (0, 0)),
            ],
            out_specs=pl.BlockSpec((k, tile_r), lambda i: (0, i)),
            compiler_params=compiler_params,
        )(x2d, wt)
        out = out[:, :Rp].T                     # (Rp, k); tiny post-processing
    else:
        out = pl.pallas_call(
            _pool_kernel_row_major,
            out_shape=jax.ShapeDtypeStruct((Rp, k), out_dtype),
            grid=(num_tiles,),
            in_specs=[
                pl.BlockSpec((tile_r, Lp), lambda i: (i, 0)),
                pl.BlockSpec((k, Lp), lambda i: (0, 0)),
            ],
            out_specs=pl.BlockSpec((tile_r, k), lambda i: (i, 0)),
            compiler_params=compiler_params,
        )(x2d, wt)

    # logical row p*k + j lives at out[p, j] -> row-major reshape recovers (N, C, 1).
    return out.reshape(N, C, 1)


def _reference(x):
    """Numpy reference reproducing PyTorch adaptive_avg_pool1d(7) -> (1)."""
    x = np.asarray(x, dtype=np.float64)
    N, C, L = x.shape
    out7 = np.zeros((N, C, 7), dtype=np.float64)
    for i in range(7):
        start = (i * L) // 7
        end = -((-(i + 1) * L) // 7)
        out7[..., i] = x[..., start:end].mean(axis=-1)
    return out7.mean(axis=-1, keepdims=True).astype(np.float32)


if __name__ == "__main__":
    key = jax.random.PRNGKey(0)
    N, C, L = 2, 4, 16
    x = jax.random.normal(key, (N, C, L), dtype=jnp.float32)

    y = model_forward(x)
    jax.block_until_ready(y)

    y_ref = _reference(np.asarray(x))
    assert y.shape == (N, C, 1), y.shape
    np.testing.assert_allclose(np.asarray(y, dtype=np.float32), y_ref,
                               rtol=1e-5, atol=1e-5)

    print("KERNEL_OK")
</pallas_src>

<mosaic_0001>
module attributes {stable_mosaic.version = 11 : i64} {
  func.func @_pool_kernel_lane_dense(%arg0: i32, %arg1: memref<1x128xf32, #tpu.memory_space<vmem>>, %arg2: memref<8x128xf32, #tpu.memory_space<vmem>>, %arg3: memref<8x1xf32, #tpu.memory_space<vmem>>) attributes {dimension_semantics = [#tpu.dimension_semantics<parallel>], iteration_bounds = array<i64: 1>, scalar_prefetch = 0 : i64, scratch_operands = 0 : i64, tpu.core_type = #tpu.core_type<tc>, window_params = [{transform_indices = @transform_0, window_bounds = array<i64: 1, 128>}, {pipeline_mode = #tpu.pipeline_mode<synchronous>, transform_indices = @transform_1, window_bounds = array<i64: 8, 128>}, {transform_indices = @transform_2, window_bounds = array<i64: 8, 1>}]} {
    %c0 = arith.constant 0 : index
    %c0_0 = arith.constant 0 : index
    %0 = vector.load %arg1[%c0, %c0_0] : memref<1x128xf32, #tpu.memory_space<vmem>>, vector<1x128xf32>
    %c0_1 = arith.constant 0 : index
    %c0_2 = arith.constant 0 : index
    %1 = vector.load %arg2[%c0_1, %c0_2] : memref<8x128xf32, #tpu.memory_space<vmem>>, vector<8x128xf32>
    %cst = arith.constant dense<0.000000e+00> : vector<8x1xf32>
    %2 = tpu.matmul %1, %0, %cst {dimension_numbers = #tpu.dot_dimension_numbers<[1], [1], [0], [0], [0, 0, 1, 0], [], []>} : vector<8x128xf32>, vector<1x128xf32>, vector<8x1xf32> -> vector<8x1xf32>
    %c0_3 = arith.constant 0 : index
    %c0_4 = arith.constant 0 : index
    %3 = vector.load %arg3[%c0_3, %c0_4] : memref<8x1xf32, #tpu.memory_space<vmem>>, vector<8x1xf32>
    tpu.vector_store %arg3[%c0_3, %c0_4], %2 {strides = array<i32>} : memref<8x1xf32, #tpu.memory_space<vmem>>, vector<8x1xf32>,
    return
  }
  func.func @transform_0(%arg0: i32) -> (i32, i32) {
    %c0_i32 = arith.constant 0 : i32
    %c0_i32_0 = arith.constant 0 : i32
    return %arg0, %c0_i32 : i32, i32
  }
  func.func @transform_1(%arg0: i32) -> (i32, i32) {
    %c0_i32 = arith.constant 0 : i32
    %c0_i32_0 = arith.constant 0 : i32
    %c0_i32_1 = arith.constant 0 : i32
    return %c0_i32, %c0_i32_0 : i32, i32
  }
  func.func @transform_2(%arg0: i32) -> (i32, i32) {
    %c0_i32 = arith.constant 0 : i32
    %c0_i32_0 = arith.constant 0 : i32
    return %c0_i32, %arg0 : i32, i32
  }
}

</mosaic_0001>

<llo_original>
// kernel: tpu_custom_call.1
$region0: #{tpu_custom_call.1}
  #allocation0 [shape = 'u32[]', space=smem, size = 0x4, offset = 0x4, fixed_abs, tag = 'smem constant byte address 0x4 - core index']
  #allocation1 [shape = 'u32[144,128]{1,0:T(1,128)}', space=vmem, size = 0x12000, scoped, tag = 'internal scratch']
  %s0 = inlined_call_operand.hbm [shape: f32[1,128], index: 0, kind: input, shape index: {}]
  %s1 = inlined_call_operand.hbm [shape: f32[8,128], index: 1, kind: input, shape index: {}]
  %s2 = inlined_call_operand.vmem [shape: f32[8,1], index: 2, kind: output, shape index: {}]
  %s3 = sld [smem:[#allocation0]]
  $region26: #{tpu_custom_call.1} parent=0
    _
  %s5 = ssub.s32 1, %s3
  %s6 = scalar_select 0, %s5, %s3
  $region1: #{tpu_custom_call.1} parent=0
    #allocation2 [shape = 'u8[512]{0}', space=vmem, size = 0x400, scoped, tag = 'input window, operand 0, single buffered']
    #allocation3 [shape = 's32[1]{0}', space=sflag, size = 0x4, scoped, tag = 'scoped memory for tpu_custom_call.1']
    #allocation4 [shape = 'u8[4096]{0}', space=vmem, size = 0x1000, scoped, tag = 'input window, operand 1, single buffered']
    #allocation5 [shape = 's32[1]{0}', space=sflag, size = 0x4, scoped, tag = 'scoped memory for tpu_custom_call.1']
    %7 = vsyncpa [#allocation3], 0
    %8 = vsyncpa [#allocation5], 0
    // Predicated region
    $region2: #{tpu_custom_call.1} parent=1 // pred_check
      _
    $region3: #{tpu_custom_call.1} parent=1 // pred_check_branch
      %10 = sbr.rel (0) target = $region5
    $region4: #{tpu_custom_call.1} parent=1 // pred_region
      %s12 = ssub.s32 16, 16
      %13 = vsyncadd [#allocation3], %s12
      %s15 = sshll.u32 [#allocation2], 4
      %s16 = int_to_ptr.vmem [resolvable:$true] %s15
      %18 = dma.hbm_to_vmem [thread:$0]  %s0, 16, %s16, [#allocation3]
    $region5: #{tpu_custom_call.1} parent=1 // pred_fallthru
      _
    // Predicated region
    $region6: #{tpu_custom_call.1} parent=1 // pred_check
      _
    $region7: #{tpu_custom_call.1} parent=1 // pred_check_branch
      %20 = sbr.rel (0) target = $region9
    $region8: #{tpu_custom_call.1} parent=1 // pred_region
      %s22 = ssub.s32 128, 128
      %23 = vsyncadd [#allocation5], %s22
      %s25 = sshll.u32 [#allocation4], 4
      %s26 = int_to_ptr.vmem [resolvable:$true] %s25
      %28 = dma.hbm_to_vmem [thread:$0]  %s1, 128, %s26, [#allocation5]
    $region9: #{tpu_custom_call.1} parent=1 // pred_fallthru
      _
    // Predicated region
    $region10: #{tpu_custom_call.1} parent=1 // pred_check
      _
    $region11: #{tpu_custom_call.1} parent=1 // pred_check_branch
      %30 = sbr.rel (0) target = $region13
    $region12: #{tpu_custom_call.1} parent=1 // pred_region
      %31 = dma.done [#allocation3], 16
    $region13: #{tpu_custom_call.1} parent=1 // pred_fallthru
      _
    // Predicated region
    $region14: #{tpu_custom_call.1} parent=1 // pred_check
      _
    $region15: #{tpu_custom_call.1} parent=1 // pred_check_branch
      %33 = sbr.rel (0) target = $region17
    $region16: #{tpu_custom_call.1} parent=1 // pred_region
      %34 = dma.done [#allocation5], 128
    $region17: #{tpu_custom_call.1} parent=1 // pred_fallthru
      _
    %v35 = vld [vmem:[#allocation2] sm:$0x1]
    %v36 = vld [vmem:[#allocation4] sm:$0xff]
    %v38 = vlaneseq
    %v39 = vshrl.u32 %v38, 7
    %v40 = vsub.s32 0, %v39
    %v41 = vrot.slane %v35, %v40
    %v43 = vmul.f32 %v36, %v41
    %44 = vadd.xlane.f32.xlu0 %v43
    %v45 = vpop.xlane.xlu0 %44
    %vm46 = vcmask 7168
    %47 = vst.msk [vmem:[%s2] sm:$0xff] %vm46, %v45
    // Predicated region
    $region18: #{tpu_custom_call.1} parent=1 // pred_check
      _
    $region19: #{tpu_custom_call.1} parent=1 // pred_check_branch
      %49 = sbr.rel (0) target = $region21
    $region20: #{tpu_custom_call.1} parent=1 // pred_region
      _
    $region21: #{tpu_custom_call.1} parent=1 // pred_fallthru
      _
    // Predicated region
    $region22: #{tpu_custom_call.1} parent=1 // pred_check
      _
    $region23: #{tpu_custom_call.1} parent=1 // pred_check_branch
      %51 = sbr.rel (0) target = $region25
    $region24: #{tpu_custom_call.1} parent=1 // pred_region
      _
    $region25: #{tpu_custom_call.1} parent=1 // pred_fallthru
      _
    %52 = vsyncpa [#allocation3], 1
    %53 = vsyncpa [#allocation5], 1

</llo_original>
